<compile_context>
chip_gen: v7x
topology: tpu7x:2x2x1
jax: 0.10.0
libtpu: 0.0.40
codegen_flags: <defaults>
</compile_context>

<pallas_src>
import functools

import jax
import jax.numpy as jnp
from jax import lax
from jax.experimental import pallas as pl
from jax.experimental.pallas import tpu as pltpu

_LANE = 128
_SUBLANE = 8


def _ceil_to(x, m):
    return ((x + m - 1) // m) * m


def _channel_var_weighted_kernel(x_ref, t_ref, o_ref, acc_ref, *,
                                 loss_fn, hw, tile_hw, n_hw_per_par, mask_needed):
    # x_ref, t_ref: (tile_n, C, tile_hw) input tiles
    # o_ref:        (tile_n, 128) lane-dense output block (one 128-lane column
    #               group per parallel spatial split), resident across axis 2
    # acc_ref:      (tile_n, tile_hw) f32 per-lane partial-sum scratch
    j = pl.program_id(2)

    @pl.when(j == 0)
    def _():
        acc_ref[...] = jnp.zeros_like(acc_ref)

    t = t_ref[...].astype(jnp.float32)          # (tile_n, C, tile_hw)
    x = x_ref[...].astype(jnp.float32)
    c = t.shape[1]
    inv_c = 1.0 / c
    # torch.var default is unbiased: /(C-1).  C == 1 -> nan (matches torch).
    inv_cm1 = (1.0 / (c - 1)) if c > 1 else float("nan")

    diff = t - x
    per_elem = diff * diff if loss_fn == "mse" else jnp.abs(diff)

    # Channel (sublane) reductions; everything below is (tile_n, tile_hw).
    sum_t = jnp.sum(t, axis=1)
    sum_t2 = jnp.sum(t * t, axis=1)
    sum_pe = jnp.sum(per_elem, axis=1)

    # One-pass unbiased variance (slightly less stable in f32 than two-pass;
    # fine for typical activation/image magnitudes), with the per-position
    # weight factored out of the C-wide product.
    var = (sum_t2 - sum_t * sum_t * inv_c) * inv_cm1
    contrib = (1.0 + var) * sum_pe

    if mask_needed:
        # Ragged spatial tiles: invalid lanes hold unspecified data, so mask
        # with a select (never a multiply) to keep NaN/Inf out of the sum.
        g = pl.program_id(0) * n_hw_per_par + j            # global spatial block
        lane = lax.broadcasted_iota(jnp.int32, contrib.shape, 1)
        valid = (g * tile_hw + lane) < hw
        contrib = jnp.where(valid, contrib, 0.0)

    acc_ref[...] += contrib

    # Cross-lane (XLU) reduce + lane-dense 128-wide store, once per (p, i).
    @pl.when(j == pl.num_programs(2) - 1)
    def _():
        row_sum = jnp.sum(acc_ref[...], axis=1, keepdims=True)   # (tile_n, 1)
        o_ref[...] = jnp.broadcast_to(row_sum, o_ref.shape)


def _vmem_capacity_bytes():
    try:
        cap = int(getattr(pltpu.get_tpu_info(), "vmem_capacity_bytes", 0) or 0)
        if cap > 0:
            return cap
    except Exception:
        pass
    return 64 << 20   # conservative fallback: v7x per-TensorCore VMEM


def _col_bytes(tile_n, c, elem_bytes):
    """VMEM bytes per spatial (lane) column: double-buffered input blocks +
    full-size f32 elementwise temporaries + accumulator scratch."""
    sub_in = _SUBLANE * max(1, 4 // elem_bytes)      # sublane tile of input dtype
    c_pad_in = _ceil_to(c, sub_in)
    c_pad_f32 = _ceil_to(c, _SUBLANE)
    b = 2 * 2 * tile_n * c_pad_in * elem_bytes       # 2 inputs x 2 pipeline buffers
    b += 4 * tile_n * c_pad_f32 * 4                  # ~4 live f32 temporaries
    b += _ceil_to(tile_n, _SUBLANE) * 4              # accumulator scratch
    return b


def _choose_tiling(N, C, HW, elem_bytes, max_tile_hw):
    """Returns (tile_n, tile_hw, n_batch, n_hw, n_par, n_hw_per_par, vmem_limit)."""
    cap = _vmem_capacity_bytes()
    # Block budget (includes temporaries): ~40 MiB on v7x (64 MiB/TC VMEM),
    # ~56 MiB on v5e/v6e (128 MiB VMEM).
    budget = min(56 << 20, (cap * 5) // 8)

    # Batch tile: a multiple of 8 (or the whole batch when N < 8) so the
    # (tile_n, 128) output block satisfies the sublane layout rule.  A ragged
    # last batch block is fine: out-of-range rows are clipped at writeback.
    tile_n = N if N < _SUBLANE else _SUBLANE
    # TODO(synk): for huge N*C with N % 8 != 0, also tile the channel axis
    # (one-pass variance makes that a simple per-lane carry) to bound VMEM.

    # Spatial tile: a single full-extent block when it fits the budget (no
    # mask, no 128-alignment requirement since block dim == array dim), else
    # balanced 128-aligned tiles as large as the budget allows.
    col = _col_bytes(tile_n, C, elem_bytes)
    cap_hw = max(_LANE, min(max_tile_hw, (budget // col) // _LANE * _LANE))
    hw128 = _ceil_to(HW, _LANE)
    if hw128 <= cap_hw:
        tile_hw = HW
    else:
        n_blocks = pl.cdiv(hw128, cap_hw)
        tile_hw = _ceil_to(pl.cdiv(hw128, n_blocks), _LANE)
    n_hw = pl.cdiv(HW, tile_hw)

    # Grow the batch tile while it divides N, keeps >= 2 batch blocks
    # (v7x megacore split) and still fits the budget — raises per-step HBM
    # bytes when the spatial extent alone can't amortize step overhead.
    while (N % (2 * tile_n) == 0 and N // (2 * tile_n) >= 2
           and _col_bytes(2 * tile_n, C, elem_bytes) * tile_hw <= budget):
        tile_n *= 2
    n_batch = pl.cdiv(N, tile_n)

    # Single batch block: split the spatial axis into two parallel halves so
    # both v7x TensorCores get work (harmless on single-core v5e/v6e).
    n_par = 2 if (n_batch == 1 and n_hw >= 2) else 1
    n_hw_per_par = pl.cdiv(n_hw, n_par)

    needed = (_col_bytes(tile_n, C, elem_bytes) * tile_hw
              + 2 * _ceil_to(tile_n, _SUBLANE) * n_par * _LANE * 4)
    vmem_limit = int(min(cap, max(32 << 20, needed + (needed >> 2) + (6 << 20))))
    return tile_n, tile_hw, n_batch, n_hw, n_par, n_hw_per_par, vmem_limit


def channel_var_weighted_loss(x, t, *, loss_fn="mse", max_tile_hw=16384):
    """x (input), t (target): (N, C, H, W). Returns (N,) float32."""
    assert x.shape == t.shape, (x.shape, t.shape)
    if loss_fn not in ("mse", "mae", "l1"):
        raise ValueError(f"unsupported loss_fn: {loss_fn}")
    N, C, H, W = x.shape
    HW = H * W
    elem_bytes = jnp.dtype(x.dtype).itemsize
    (tile_n, tile_hw, n_batch, n_hw, n_par, n_hw_pp,
     vmem_limit) = _choose_tiling(N, C, HW, elem_bytes, max_tile_hw)

    # Metadata-only reshape: no padded HBM copies of either input.
    x3 = x.reshape(N, C, HW)
    t3 = t.reshape(N, C, HW)

    # Mask only when some lane of some tile falls outside [0, HW).
    mask_needed = (n_par * n_hw_pp * tile_hw != HW)

    if n_par == 1:
        in_idx = lambda p, i, j: (i, 0, j)
    else:
        last_blk = n_hw - 1
        # Clamp keeps the block index in range when the two halves don't cover
        # the spatial blocks evenly; the overflow tile is fully masked anyway.
        in_idx = lambda p, i, j: (i, 0, jnp.minimum(p * n_hw_pp + j, last_blk))

    kernel = functools.partial(
        _channel_var_weighted_kernel, loss_fn=loss_fn, hw=HW, tile_hw=tile_hw,
        n_hw_per_par=n_hw_pp, mask_needed=mask_needed)

    out = pl.pallas_call(
        kernel,
        out_shape=jax.ShapeDtypeStruct((N, n_par * _LANE), jnp.float32),
        grid_spec=pltpu.PrefetchScalarGridSpec(
            num_scalar_prefetch=0,
            grid=(n_par, n_batch, n_hw_pp),
            in_specs=[
                # pipeline_mode=pl.Buffered(3) is a possible further knob if a
                # trace still shows exposed input DMA at these block sizes.
                pl.BlockSpec((tile_n, C, tile_hw), in_idx),
                pl.BlockSpec((tile_n, C, tile_hw), in_idx),
            ],
            out_specs=pl.BlockSpec((tile_n, _LANE), lambda p, i, j: (i, p)),
            scratch_shapes=[pltpu.VMEM((tile_n, tile_hw), jnp.float32)],
        ),
        compiler_params=pltpu.CompilerParams(
            # Spatial-split and batch axes can be sharded across TensorCores;
            # the innermost spatial axis reduces into resident state.
            dimension_semantics=("parallel", "parallel", "arbitrary"),
            vmem_limit_bytes=vmem_limit,
        ),
    )(x3, t3)

    # Lane 0 of each 128-lane column group holds one partial per parallel split.
    per_split = out.reshape(N, n_par, _LANE)[:, :, 0]
    return jnp.sum(per_split, axis=1) if n_par > 1 else per_split[:, 0]


def _reference(x, t, loss_fn="mse"):
    # Pure-JAX reference mirroring the PyTorch module (computed in f32).
    x = x.astype(jnp.float32)
    t = t.astype(jnp.float32)
    w = 1.0 + jnp.var(t, axis=1, keepdims=True, ddof=1)
    diff = t - x
    per = diff ** 2 if loss_fn == "mse" else jnp.abs(diff)
    return (w * per).reshape(t.shape[0], -1).sum(axis=-1)


if __name__ == "__main__":
    key = jax.random.PRNGKey(0)

    cases = [
        ((2, 4, 16, 16), "mse", jnp.float32),     # aligned spatial, single block
        ((2, 3, 10, 10), "mse", jnp.float32),     # C=3, HW<128 full-extent block
        ((16, 4, 16, 16), "mse", jnp.float32),    # multiple parallel batch blocks
        ((12, 4, 16, 16), "mse", jnp.float32),    # ragged last batch block (N%8!=0)
        ((2, 4, 16, 16), "mae", jnp.float32),     # l1 variant
        ((2, 4, 16, 16), "mse", jnp.bfloat16),    # bf16 streaming, f32 accumulation
        ((2, 4, 144, 144), "mse", jnp.float32),   # 2-way parallel spatial split (v7x)
        ((2, 4, 200, 200), "mae", jnp.float32),   # parallel split + ragged tile mask
    ]
    for shape, lf, dt in cases:
        key, k1, k2 = jax.random.split(key, 3)
        x = jax.random.normal(k1, shape, dtype=jnp.float32).astype(dt)
        t = jax.random.normal(k2, shape, dtype=jnp.float32).astype(dt)
        out = jax.block_until_ready(channel_var_weighted_loss(x, t, loss_fn=lf))
        ref = _reference(x, t, lf)
        assert out.shape == (shape[0],), (shape, lf, out.shape)
        assert bool(jnp.allclose(out, ref, rtol=1e-3, atol=1e-3)), (shape, lf, dt, out, ref)

    print("KERNEL_OK")
</pallas_src>

<mosaic_0001>
module attributes {stable_mosaic.version = 11 : i64} {
  func.func @_channel_var_weighted_kernel(%arg0: i32, %arg1: i32, %arg2: i32, %arg3: memref<2x4x256xf32, #tpu.memory_space<vmem>>, %arg4: memref<2x4x256xf32, #tpu.memory_space<vmem>>, %arg5: memref<2x128xf32, #tpu.memory_space<vmem>>, %arg6: memref<2x256xf32, #tpu.memory_space<vmem>>) attributes {dimension_semantics = [#tpu.dimension_semantics<parallel>, #tpu.dimension_semantics<parallel>, #tpu.dimension_semantics<arbitrary>], iteration_bounds = array<i64: 1, 1, 1>, scalar_prefetch = 0 : i64, scratch_operands = 1 : i64, tpu.core_type = #tpu.core_type<tc>, window_params = [{transform_indices = @transform_0, window_bounds = array<i64: 2, 4, 256>}, {transform_indices = @transform_1, window_bounds = array<i64: 2, 4, 256>}, {transform_indices = @transform_2, window_bounds = array<i64: 2, 128>}]} {
    %c0_i32 = arith.constant 0 : i32
    %0 = arith.cmpi eq, %arg2, %c0_i32 : i32
    %1 = arith.extui %0 : i1 to i32
    %c0_i32_0 = arith.constant 0 : i32
    %2 = arith.cmpi ne, %1, %c0_i32_0 : i32
    scf.if %2 {
      %cst_17 = arith.constant 0.000000e+00 : f32
      %26 = vector.broadcast %cst_17 : f32 to vector<2x256xf32>
      %c0_18 = arith.constant 0 : index
      %c0_19 = arith.constant 0 : index
      %27 = vector.load %arg6[%c0_18, %c0_19] : memref<2x256xf32, #tpu.memory_space<vmem>>, vector<2x256xf32>
      tpu.vector_store %arg6[%c0_18, %c0_19], %26 {strides = array<i32>} : memref<2x256xf32, #tpu.memory_space<vmem>>, vector<2x256xf32>,
    } else {
    }
    %c0 = arith.constant 0 : index
    %c0_1 = arith.constant 0 : index
    %c0_2 = arith.constant 0 : index
    %3 = vector.load %arg4[%c0, %c0_1, %c0_2] : memref<2x4x256xf32, #tpu.memory_space<vmem>>, vector<2x4x256xf32>
    %c0_3 = arith.constant 0 : index
    %c0_4 = arith.constant 0 : index
    %c0_5 = arith.constant 0 : index
    %4 = vector.load %arg3[%c0_3, %c0_4, %c0_5] : memref<2x4x256xf32, #tpu.memory_space<vmem>>, vector<2x4x256xf32>
    %5 = arith.subf %3, %4 : vector<2x4x256xf32>
    %6 = arith.mulf %5, %5 : vector<2x4x256xf32>
    %cst = arith.constant dense<0.000000e+00> : vector<2x256xf32>
    %7 = vector.multi_reduction <add>, %3, %cst [1] : vector<2x4x256xf32> to vector<2x256xf32>
    %8 = arith.mulf %3, %3 : vector<2x4x256xf32>
    %cst_6 = arith.constant dense<0.000000e+00> : vector<2x256xf32>
    %9 = vector.multi_reduction <add>, %8, %cst_6 [1] : vector<2x4x256xf32> to vector<2x256xf32>
    %cst_7 = arith.constant dense<0.000000e+00> : vector<2x256xf32>
    %10 = vector.multi_reduction <add>, %6, %cst_7 [1] : vector<2x4x256xf32> to vector<2x256xf32>
    %11 = arith.mulf %7, %7 : vector<2x256xf32>
    %cst_8 = arith.constant 2.500000e-01 : f32
    %12 = vector.broadcast %cst_8 : f32 to vector<2x256xf32>
    %13 = arith.mulf %11, %12 : vector<2x256xf32>
    %14 = arith.subf %9, %13 : vector<2x256xf32>
    %cst_9 = arith.constant 0.333333343 : f32
    %15 = vector.broadcast %cst_9 : f32 to vector<2x256xf32>
    %16 = arith.mulf %14, %15 : vector<2x256xf32>
    %cst_10 = arith.constant 1.000000e+00 : f32
    %17 = vector.broadcast %cst_10 : f32 to vector<2x256xf32>
    %18 = arith.addf %17, %16 : vector<2x256xf32>
    %19 = arith.mulf %18, %10 : vector<2x256xf32>
    %c0_11 = arith.constant 0 : index
    %c0_12 = arith.constant 0 : index
    %20 = vector.load %arg6[%c0_11, %c0_12] : memref<2x256xf32, #tpu.memory_space<vmem>>, vector<2x256xf32>
    %21 = arith.addf %20, %19 : vector<2x256xf32>
    %c0_13 = arith.constant 0 : index
    %c0_14 = arith.constant 0 : index
    %22 = vector.load %arg6[%c0_13, %c0_14] : memref<2x256xf32, #tpu.memory_space<vmem>>, vector<2x256xf32>
    tpu.vector_store %arg6[%c0_13, %c0_14], %21 {strides = array<i32>} : memref<2x256xf32, #tpu.memory_space<vmem>>, vector<2x256xf32>,
    %c0_i32_15 = arith.constant 0 : i32
    %23 = arith.cmpi eq, %arg2, %c0_i32_15 : i32
    %24 = arith.extui %23 : i1 to i32
    %c0_i32_16 = arith.constant 0 : i32
    %25 = arith.cmpi ne, %24, %c0_i32_16 : i32
    scf.if %25 {
      %c0_17 = arith.constant 0 : index
      %c0_18 = arith.constant 0 : index
      %26 = vector.load %arg6[%c0_17, %c0_18] : memref<2x256xf32, #tpu.memory_space<vmem>>, vector<2x256xf32>
      %cst_19 = arith.constant dense<0.000000e+00> : vector<2xf32>
      %27 = vector.multi_reduction <add>, %26, %cst_19 [1] : vector<2x256xf32> to vector<2xf32>
      %28 = vector.shape_cast %27 : vector<2xf32> to vector<2x1xf32>
      %29 = vector.shape_cast %28 : vector<2x1xf32> to vector<2x1xf32>
      %30 = vector.broadcast %29 : vector<2x1xf32> to vector<2x128xf32>
      %c0_20 = arith.constant 0 : index
      %c0_21 = arith.constant 0 : index
      %31 = vector.load %arg5[%c0_20, %c0_21] : memref<2x128xf32, #tpu.memory_space<vmem>>, vector<2x128xf32>
      tpu.vector_store %arg5[%c0_20, %c0_21], %30 {strides = array<i32>} : memref<2x128xf32, #tpu.memory_space<vmem>>, vector<2x128xf32>,
    } else {
    }
    return
  }
  func.func @transform_0(%arg0: i32, %arg1: i32, %arg2: i32) -> (i32, i32, i32) {
    %c0_i32 = arith.constant 0 : i32
    %c0_i32_0 = arith.constant 0 : i32
    return %arg1, %c0_i32, %arg2 : i32, i32, i32
  }
  func.func @transform_1(%arg0: i32, %arg1: i32, %arg2: i32) -> (i32, i32, i32) {
    %c0_i32 = arith.constant 0 : i32
    %c0_i32_0 = arith.constant 0 : i32
    return %arg1, %c0_i32, %arg2 : i32, i32, i32
  }
  func.func @transform_2(%arg0: i32, %arg1: i32, %arg2: i32) -> (i32, i32) {
    %c0_i32 = arith.constant 0 : i32
    return %arg1, %arg0 : i32, i32
  }
}

</mosaic_0001>

<llo_original>
// kernel: tpu_custom_call.1
$region0: #{tpu_custom_call.1}
  #allocation0 [shape = 'u32[]', space=smem, size = 0x4, offset = 0x4, fixed_abs, tag = 'smem constant byte address 0x4 - core index']
  #allocation1 [shape = 'u32[144,128]{1,0:T(1,128)}', space=vmem, size = 0x12000, scoped, tag = 'internal scratch']
  #allocation2 [shape = 'f32[2,256]{1,0:T(2,128)}', space=vmem, size = 0x800, scoped, tag = 'scratch operand']
  %s0 = inlined_call_operand.hbm [shape: f32[2,4,256], index: 0, kind: input, shape index: {}]
  %s1 = inlined_call_operand.hbm [shape: f32[2,4,256], index: 1, kind: input, shape index: {}]
  %s2 = inlined_call_operand.hbm [shape: f32[2,128], index: 2, kind: output, shape index: {}]
  %s3 = sld [smem:[#allocation0]]
  $region34: #{tpu_custom_call.1} parent=0
    _
  %s5 = ssub.s32 1, %s3
  %s6 = scalar_select 0, %s5, %s3
  $region1: #{tpu_custom_call.1} parent=0
    #allocation3 [shape = 'u8[8192]{0}', space=vmem, size = 0x2000, scoped, tag = 'input window, operand 0, single buffered']
    #allocation4 [shape = 's32[1]{0}', space=sflag, size = 0x4, scoped, tag = 'scoped memory for tpu_custom_call.1']
    #allocation5 [shape = 's32[1]{0}', space=sflag, size = 0x4, scoped, tag = 'scoped memory for tpu_custom_call.1']
    #allocation6 [shape = 'u8[8192]{0}', space=vmem, size = 0x2000, scoped, tag = 'input window, operand 1, single buffered']
    #allocation7 [shape = 's32[1]{0}', space=sflag, size = 0x4, scoped, tag = 'scoped memory for tpu_custom_call.1']
    #allocation8 [shape = 'u8[1024]{0}', space=vmem, size = 0x400, scoped, tag = 'output window, operand 0, single buffered']
    %7 = vsyncpa [#allocation4], 0
    %8 = vsyncpa [#allocation7], 0
    %9 = vsyncpa [#allocation5], 0
    // Predicated region
    $region2: #{tpu_custom_call.1} parent=1 // pred_check
      _
    $region3: #{tpu_custom_call.1} parent=1 // pred_check_branch
      %11 = sbr.rel (0) target = $region5
    $region4: #{tpu_custom_call.1} parent=1 // pred_region
      %s13 = ssub.s32 256, 256
      %14 = vsyncadd [#allocation4], %s13
      %s15 = sshll.u32 [#allocation3], 4
      %s16 = int_to_ptr.vmem [resolvable:$true] %s15
      %21 = dma.hbm_to_vmem [thread:$0]  %s0, 256, %s16, [#allocation4], 128, 128, 8
    $region5: #{tpu_custom_call.1} parent=1 // pred_fallthru
      _
    // Predicated region
    $region6: #{tpu_custom_call.1} parent=1 // pred_check
      _
    $region7: #{tpu_custom_call.1} parent=1 // pred_check_branch
      %23 = sbr.rel (0) target = $region9
    $region8: #{tpu_custom_call.1} parent=1 // pred_region
      %s25 = ssub.s32 256, 256
      %26 = vsyncadd [#allocation7], %s25
      %s27 = sshll.u32 [#allocation6], 4
      %s28 = int_to_ptr.vmem [resolvable:$true] %s27
      %33 = dma.hbm_to_vmem [thread:$0]  %s1, 256, %s28, [#allocation7], 128, 128, 8
    $region9: #{tpu_custom_call.1} parent=1 // pred_fallthru
      _
    // Predicated region
    $region10: #{tpu_custom_call.1} parent=1 // pred_check
      _
    $region11: #{tpu_custom_call.1} parent=1 // pred_check_branch
      %35 = sbr.rel (0) target = $region13
    $region12: #{tpu_custom_call.1} parent=1 // pred_region
      %36 = dma.done [#allocation4], 256
    $region13: #{tpu_custom_call.1} parent=1 // pred_fallthru
      _
    // Predicated region
    $region14: #{tpu_custom_call.1} parent=1 // pred_check
      _
    $region15: #{tpu_custom_call.1} parent=1 // pred_check_branch
      %38 = sbr.rel (0) target = $region17
    $region16: #{tpu_custom_call.1} parent=1 // pred_region
      %39 = dma.done [#allocation7], 256
    $region17: #{tpu_custom_call.1} parent=1 // pred_fallthru
      _
    %p40 = scmp.eq.s32.totalorder 0, 0
    // Predicated region
    $region18: #{tpu_custom_call.1} parent=1 // pred_check
      %p41 = pneg %p40
    $region19: #{tpu_custom_call.1} parent=1 // pred_check_branch
      %43 = sbr.rel (%p41) target = $region21
    $region20: #{tpu_custom_call.1} parent=1 // pred_region
      %44 = vst [vmem:[#allocation2] sm:$0xf] 0.0
    $region21: #{tpu_custom_call.1} parent=1 // pred_fallthru
      _
    %v45 = vld [vmem:[#allocation6] sm:$0xff]
    %v46 = vld [vmem:[#allocation6 + $0x8] sm:$0xff]
    %v47 = vld [vmem:[#allocation3] sm:$0xff]
    %v48 = vld [vmem:[#allocation3 + $0x8] sm:$0xff]
    %v49 = vsub.f32 %v45, %v47
    %v50 = vsub.f32 %v46, %v48
    %v51 = vmul.f32 %v49, %v49
    %v52 = vmul.f32 %v50, %v50
    %v55 = vcombine.high %v45, %v45
    %v56 = vcombine.high %v46, %v46
    %vm59 = vcmask 1043456
    %v60 = vsel %vm59, %v45, 0.0
    %v61 = vrot.slane %v60, 4
    %v62 = vadd.f32 %v60, %v61
    %v63 = vrot.slane %v62, 2
    %v64 = vadd.f32 %v62, %v63
    %v65 = vrot.slane %v64, 1
    %v66 = vadd.f32 %v64, %v65
    %v67 = vsel %vm59, %v55, 0.0
    %v68 = vrot.slane %v67, 4
    %v69 = vadd.f32 %v67, %v68
    %v70 = vrot.slane %v69, 2
    %v71 = vadd.f32 %v69, %v70
    %v72 = vrot.slane %v71, 1
    %v73 = vadd.f32 %v71, %v72
    %v74 = vsel %vm59, %v46, 0.0
    %v75 = vrot.slane %v74, 4
    %v76 = vadd.f32 %v74, %v75
    %v77 = vrot.slane %v76, 2
    %v78 = vadd.f32 %v76, %v77
    %v79 = vrot.slane %v78, 1
    %v80 = vadd.f32 %v78, %v79
    %v81 = vsel %vm59, %v56, 0.0
    %v82 = vrot.slane %v81, 4
    %v83 = vadd.f32 %v81, %v82
    %v84 = vrot.slane %v83, 2
    %v85 = vadd.f32 %v83, %v84
    %v86 = vrot.slane %v85, 1
    %v87 = vadd.f32 %v85, %v86
    %v88 = vmul.f32 %v45, %v45
    %v89 = vmul.f32 %v46, %v46
    %v92 = vcombine.high %v88, %v88
    %v93 = vcombine.high %v89, %v89
    %v96 = vsel %vm59, %v88, 0.0
    %v97 = vrot.slane %v96, 4
    %v98 = vadd.f32 %v96, %v97
    %v99 = vrot.slane %v98, 2
    %v100 = vadd.f32 %v98, %v99
    %v101 = vrot.slane %v100, 1
    %v102 = vadd.f32 %v100, %v101
    %v103 = vsel %vm59, %v92, 0.0
    %v104 = vrot.slane %v103, 4
    %v105 = vadd.f32 %v103, %v104
    %v106 = vrot.slane %v105, 2
    %v107 = vadd.f32 %v105, %v106
    %v108 = vrot.slane %v107, 1
    %v109 = vadd.f32 %v107, %v108
    %v110 = vsel %vm59, %v89, 0.0
    %v111 = vrot.slane %v110, 4
    %v112 = vadd.f32 %v110, %v111
    %v113 = vrot.slane %v112, 2
    %v114 = vadd.f32 %v112, %v113
    %v115 = vrot.slane %v114, 1
    %v116 = vadd.f32 %v114, %v115
    %v117 = vsel %vm59, %v93, 0.0
    %v118 = vrot.slane %v117, 4
    %v119 = vadd.f32 %v117, %v118
    %v120 = vrot.slane %v119, 2
    %v121 = vadd.f32 %v119, %v120
    %v122 = vrot.slane %v121, 1
    %v123 = vadd.f32 %v121, %v122
    %v126 = vcombine.high %v51, %v51
    %v127 = vcombine.high %v52, %v52
    %v130 = vsel %vm59, %v51, 0.0
    %v131 = vrot.slane %v130, 4
    %v132 = vadd.f32 %v130, %v131
    %v133 = vrot.slane %v132, 2
    %v134 = vadd.f32 %v132, %v133
    %v135 = vrot.slane %v134, 1
    %v136 = vadd.f32 %v134, %v135
    %v137 = vsel %vm59, %v126, 0.0
    %v138 = vrot.slane %v137, 4
    %v139 = vadd.f32 %v137, %v138
    %v140 = vrot.slane %v139, 2
    %v141 = vadd.f32 %v139, %v140
    %v142 = vrot.slane %v141, 1
    %v143 = vadd.f32 %v141, %v142
    %v144 = vsel %vm59, %v52, 0.0
    %v145 = vrot.slane %v144, 4
    %v146 = vadd.f32 %v144, %v145
    %v147 = vrot.slane %v146, 2
    %v148 = vadd.f32 %v146, %v147
    %v149 = vrot.slane %v148, 1
    %v150 = vadd.f32 %v148, %v149
    %v151 = vsel %vm59, %v127, 0.0
    %v152 = vrot.slane %v151, 4
    %v153 = vadd.f32 %v151, %v152
    %v154 = vrot.slane %v153, 2
    %v155 = vadd.f32 %v153, %v154
    %v156 = vrot.slane %v155, 1
    %v157 = vadd.f32 %v155, %v156
    %v158 = vmul.f32 %v66, %v66
    %v159 = vmul.f32 %v73, %v73
    %v160 = vmul.f32 %v80, %v80
    %v161 = vmul.f32 %v87, %v87
    %v162 = vmul.f32 %v158, 0.25
    %v163 = vmul.f32 %v159, 0.25
    %v164 = vmul.f32 %v160, 0.25
    %v165 = vmul.f32 %v161, 0.25
    %v166 = vsub.f32 %v102, %v162
    %v167 = vsub.f32 %v109, %v163
    %v168 = vsub.f32 %v116, %v164
    %v169 = vsub.f32 %v123, %v165
    %v170 = vmul.f32 %v166, 0.33333334
    %v171 = vmul.f32 %v167, 0.33333334
    %v172 = vmul.f32 %v168, 0.33333334
    %v173 = vmul.f32 %v169, 0.33333334
    %v174 = vadd.f32 %v170, 1.0
    %v175 = vadd.f32 %v171, 1.0
    %v176 = vadd.f32 %v172, 1.0
    %v177 = vadd.f32 %v173, 1.0
    %v178 = vmul.f32 %v174, %v136
    %v179 = vmul.f32 %v175, %v143
    %v180 = vmul.f32 %v176, %v150
    %v181 = vmul.f32 %v177, %v157
    %v182 = vld [vmem:[#allocation2] sm:$0xf]
    %v187 = vcombine.low %v178, %v179
    %v189 = vunpack.c.l.s4 1983009808
    %v190 = vunpack.c.0.s8 %v189
    %v191 = vlaneseq
    %v192 = vshrl.u32 %v191, 7
    %v193 = vsub.s32 %v190, %v192
    %v194 = vrot.slane %v187, %v193
    %v195 = vcombine.low %v180, %v181
    %v197 = vunpack.c.l.s4 1983009808
    %v198 = vunpack.c.0.s8 %v197
    %v199 = vlaneseq
    %v200 = vshrl.u32 %v199, 7
    %v201 = vsub.s32 %v198, %v200
    %v202 = vrot.slane %v195, %v201
    %vm203 = vcmask 1044484
    %v204 = vsel %vm203, %v194, %v194
    %vm205 = vcmask 1046534
    %v206 = vsel %vm205, %v194, %v204
    %v207 = vrot.slane %v202, 7
    %vm208 = vcmask 1041409
    %v209 = vsel %vm208, %v207, %v206
    %vm210 = vcmask 1043459
    %v211 = vsel %vm210, %v207, %v209
    %vm212 = vcmask 1045509
    %v213 = vsel %vm212, %v207, %v211
    %vm214 = vcmask 1047559
    %v215 = vsel %vm214, %v207, %v213
    %v217 = vadd.f32 %v182, %v215
    %218 = vst [vmem:[#allocation2] sm:$0xf] %v217
    // Predicated region
    $region22: #{tpu_custom_call.1} parent=1 // pred_check
      %p219 = pneg %p40
    $region23: #{tpu_custom_call.1} parent=1 // pred_check_branch
      %221 = sbr.rel (%p219) target = $region25
    $region24: #{tpu_custom_call.1} parent=1 // pred_region
      %v222 = vld [vmem:[#allocation2] sm:$0xf]
      %v225 = vunpack.c.l.s4 1983009808
      %v226 = vunpack.c.0.s8 %v225
      %v227 = vlaneseq
      %v228 = vshrl.u32 %v227, 7
      %v229 = vsub.s32 %v226, %v228
      %v230 = vrot.slane %v222, %v229
      %v231 = vcombine.high %v230, %v230
      %vm234 = vcmask 1041408
      %v235 = vsel %vm234, %v230, 0.0
      %v236 = vsel %vm234, %v231, 0.0
      %v237 = vadd.f32 %v235, %v236
      %238 = vadd.xlane.f32.xlu0 %v237
      %v239 = vpop.xlane.xlu0 %238
      %240 = vst [vmem:[#allocation8] sm:$0x3] %v239
    $region25: #{tpu_custom_call.1} parent=1 // pred_fallthru
      _
    // Predicated region
    $region26: #{tpu_custom_call.1} parent=1 // pred_check
      _
    $region27: #{tpu_custom_call.1} parent=1 // pred_check_branch
      %242 = sbr.rel (0) target = $region29
    $region28: #{tpu_custom_call.1} parent=1 // pred_region
      %s244 = ssub.s32 32, 32
      %245 = vsyncadd [#allocation5], %s244
      %s247 = sshll.u32 [#allocation8], 4
      %s248 = int_to_ptr.vmem [resolvable:$true] %s247
      %250 = dma.vmem_to_hbm [thread:$0]  %s248, 32, %s2, [#allocation5]
    $region29: #{tpu_custom_call.1} parent=1 // pred_fallthru
      _
    // Predicated region
    $region30: #{tpu_custom_call.1} parent=1 // pred_check
      _
    $region31: #{tpu_custom_call.1} parent=1 // pred_check_branch
      %252 = sbr.rel (0) target = $region33
    $region32: #{tpu_custom_call.1} parent=1 // pred_region
      %253 = dma.done [#allocation5], 32
    $region33: #{tpu_custom_call.1} parent=1 // pred_fallthru
      _
    %254 = vsyncpa [#allocation4], 1
    %255 = vsyncpa [#allocation7], 1
    %256 = vsyncpa [#allocation5], 1

</llo_original>
